<compile_context>
chip_gen: v5e
topology: v5e:2x2
jax: 0.10.0
libtpu: 0.0.40
codegen_flags: <defaults>
</compile_context>

<pallas_src>
import functools

import jax
import jax.numpy as jnp
from jax.experimental import pallas as pl
from jax.experimental.pallas import tpu as pltpu


def _round_up(a, m):
    return (a + m - 1) // m * m


# ---------------------------------------------------------------------------
# Pallas kernel: fused tap-folded conv + bias + ReLU
# ---------------------------------------------------------------------------
def _make_conv_kernel(tap_offsets, tile_j):
    """Build the kernel for a fixed (tap_offsets, tile_j) geometry.

    Refs per grid step (b, j):
      xl_ref: (1, C_in, tile_j)      main window of the flat padded image (bf16)
      xh_ref: (1, C_in, halo)        halo window immediately following it (bf16)
      w_ref:  (C_out, ks*ks*C_in)    tap-folded weight matrix (bf16, resident)
      b_ref:  (C_out, 1)             bias column (f32, resident)
      o_ref:  (1, C_out, tile_j)     channels-first, lane-dense output tile
    """
    def kernel(xl_ref, xh_ref, w_ref, b_ref, o_ref):
        # Streamed operands stay bf16 all the way to the MXU (native path on
        # v5e/v6e/v7x); only the accumulate / bias / ReLU run in f32.
        xcat = jnp.concatenate([xl_ref[0], xh_ref[0]], axis=-1)    # (C_in, tile_j+halo)
        # Tap-folded "im2col in VMEM": row-block t is the window shifted by
        # the static tap offset d_t.  Built once, consumed by one matmul.
        slab = jnp.concatenate(
            [xcat[:, d:d + tile_j] for d in tap_offsets], axis=0)  # (ks*ks*C_in, tile_j)
        # Single MXU push per grid step, K = ks*ks*C_in, f32 accumulate.
        acc = jnp.dot(w_ref[...], slab,
                      preferred_element_type=jnp.float32)          # (C_out, tile_j) f32
        acc = acc + b_ref[...]                                      # (C_out, 1) bcast on lanes
        # TODO(synk): non_lin is hard-coded to ReLU (backward gates on z >= 0).
        o_ref[0] = jnp.maximum(acc, 0.0).astype(o_ref.dtype)
    return kernel


# ---------------------------------------------------------------------------
# Wrapper
# ---------------------------------------------------------------------------
@functools.partial(jax.jit, static_argnames=("tile_m", "compute_dtype", "out_dtype"))
def delayed_conv_forward(x, weight, bias, *, tile_m=512,
                         compute_dtype=jnp.bfloat16, out_dtype=None):
    """Forward of DelayedConv.

    x:      (B, C_in, H, W)   NCHW, float32
    weight: (C_out, C_in, ks, ks)
    bias:   (1, C_out)
    returns (B, C_out, H, W) in out_dtype (default: x.dtype)
    """
    B, C_in, H, W = x.shape
    C_out, _, ks, _ = weight.shape
    out_dtype = x.dtype if out_dtype is None else out_dtype
    pad = ks // 2
    Hp, Wp = H + 2 * pad, W + 2 * pad

    # Tap offsets inside the flattened (Hp * Wp) padded image.
    taps = tuple(kh * Wp + kw for kh in range(ks) for kw in range(ks))
    d_max = taps[-1]

    # --- lane-tile geometry --------------------------------------------------
    # tile_j is a multiple of the 128-rounded halo so the halo BlockSpec
    # indexes whole blocks; cdiv grid + zero padding handle any B / H / W.
    halo = max(128, _round_up(d_max, 128))
    j_out = H * Wp                                    # flat span covering all outputs
    tile_j = max(halo, min(_round_up(tile_m, halo), _round_up(j_out, halo)))

    def num_tiles(tj):
        return -(-j_out // tj)

    # (a) enough grid steps to feed both v7x TensorCores and the DMA pipeline.
    while tile_j > halo and B * num_tiles(tile_j) < 8:
        tile_j -= halo

    # (b) conservative VMEM budget (v7x: 64 MiB physical / 32 MiB default
    #     scoped).  Includes the pipelined HBM buffers AND in-kernel temporaries.
    in_itemsize = jnp.dtype(compute_dtype).itemsize
    out_itemsize = jnp.dtype(out_dtype).itemsize

    def vmem_bytes(tj):
        pipelined = (2 * C_in * (tj + halo) * in_itemsize        # bf16 main+halo, 2-deep
                     + 2 * C_out * tj * out_itemsize             # output tile, 2-deep
                     + 2 * (ks * ks * C_out * C_in * in_itemsize # resident weights
                            + C_out * 4))                        # resident bias
        temporaries = (C_in * (tj + halo) * in_itemsize          # xcat
                       + ks * ks * C_in * tj * in_itemsize       # tap-folded slab
                       + 2 * C_out * tj * 4)                     # f32 acc + biased/relu
        return pipelined + temporaries

    while tile_j > halo and vmem_bytes(tile_j) > (20 << 20):
        tile_j -= halo

    assert tile_j % halo == 0, "halo index_map requires tile_j % halo == 0"
    num_j = num_tiles(tile_j)
    m_out = num_j * tile_j
    l_pad = m_out + halo

    # --- glue: one fused XLA pad+reshape+cast pass (NO im2col in HBM) --------
    xp = jnp.pad(x, ((0, 0), (0, 0), (pad, pad), (pad, pad)))
    x_flat = xp.reshape(B, C_in, Hp * Wp)
    x_flat = jnp.pad(x_flat, ((0, 0), (0, 0), (0, l_pad - Hp * Wp)))
    x_flat = x_flat.astype(compute_dtype)

    # Tap-folded weights (C_out, ks*ks*C_in); contraction index = (kh*ks+kw)*C_in + ci,
    # matching the sublane-stacked slab built in the kernel.
    w2 = jnp.transpose(weight, (0, 2, 3, 1)).reshape(C_out, ks * ks * C_in)
    w2 = w2.astype(compute_dtype)
    b_col = bias.reshape(C_out, 1).astype(jnp.float32)

    kernel = _make_conv_kernel(taps, tile_j)
    vmem_limit = int(min(32 << 20, max(16 << 20, 4 * vmem_bytes(tile_j))))

    out_flat = pl.pallas_call(
        kernel,
        out_shape=jax.ShapeDtypeStruct((B, C_out, m_out), out_dtype),
        grid_spec=pltpu.PrefetchScalarGridSpec(
            num_scalar_prefetch=0,
            grid=(B, num_j),
            in_specs=[
                # main window of the flat padded image
                pl.BlockSpec((1, C_in, tile_j), lambda b, j: (b, 0, j)),
                # 128-lane-aligned halo window starting right after it
                pl.BlockSpec((1, C_in, halo),
                             lambda b, j: (b, 0, (j + 1) * (tile_j // halo))),
                # resident tap-folded weights and bias (constant index_map -> no re-DMA)
                pl.BlockSpec((C_out, ks * ks * C_in), lambda b, j: (0, 0)),
                pl.BlockSpec((C_out, 1), lambda b, j: (0, 0)),
            ],
            # channels-first, lane-dense output tile (multiple of 128 lanes)
            out_specs=pl.BlockSpec((1, C_out, tile_j), lambda b, j: (b, 0, j)),
        ),
        compiler_params=pltpu.CompilerParams(
            dimension_semantics=("parallel", "parallel"),
            vmem_limit_bytes=vmem_limit,
        ),
    )(x_flat, x_flat, w2, b_col)

    # Result is already channels-first; drop padded columns / tail with one
    # fused slice.  (Can be folded into the consumer if a Wp-wide layout is
    # acceptable downstream.)
    out = out_flat[:, :, :H * Wp].reshape(B, C_out, H, Wp)
    if W != Wp:
        out = out[..., :W]
    return out


# ---------------------------------------------------------------------------
# Deterministic parameter init (xavier-uniform, matching __init__ shapes)
# ---------------------------------------------------------------------------
def init_params(key, in_channels, out_channels, kernel_size):
    kw_key, kb_key = jax.random.split(key)
    fan_in = in_channels * kernel_size * kernel_size
    fan_out = out_channels * kernel_size * kernel_size
    w_bound = (6.0 / (fan_in + fan_out)) ** 0.5
    weight = jax.random.uniform(
        kw_key, (out_channels, in_channels, kernel_size, kernel_size),
        minval=-w_bound, maxval=w_bound, dtype=jnp.float32)
    b_bound = (6.0 / (1 + out_channels)) ** 0.5
    bias = jax.random.uniform(
        kb_key, (1, out_channels), minval=-b_bound, maxval=b_bound,
        dtype=jnp.float32)
    return weight, bias


# ---------------------------------------------------------------------------
# Reference (pure JAX) for correctness check
# ---------------------------------------------------------------------------
def reference_forward(x, weight, bias):
    ks = weight.shape[-1]
    z = jax.lax.conv_general_dilated(
        x, weight, window_strides=(1, 1),
        padding=[(ks // 2, ks // 2), (ks // 2, ks // 2)],
        dimension_numbers=("NCHW", "OIHW", "NCHW"))
    z = z + bias.reshape(1, -1, 1, 1)
    return jnp.maximum(z, 0.0)


if __name__ == "__main__":
    key = jax.random.PRNGKey(0)
    k_x, k_p = jax.random.split(key)

    B, C_in, H, W = 2, 4, 16, 16
    C_out, ks = 8, 3

    x = jax.random.normal(k_x, (B, C_in, H, W), dtype=jnp.float32)
    weight, bias = init_params(k_p, C_in, C_out, ks)

    # NOTE: e_trace_mat / delta_mat / grad_func / sparse_inputs only affect
    # backward(); the forward pass implemented here does not use them.
    # TODO(synk): backward (eligibility-trace weight/input grads) not
    # implemented — only the forward pass is required here.

    out = jax.block_until_ready(delayed_conv_forward(x, weight, bias))
    assert out.shape == (B, C_out, H, W)
    assert out.dtype == x.dtype

    # Like-for-like reference: same bf16 rounding of the streamed operands,
    # f32 accumulate + bias + ReLU.
    xq = x.astype(jnp.bfloat16).astype(jnp.float32)
    wq = weight.astype(jnp.bfloat16).astype(jnp.float32)
    ref = reference_forward(xq, wq, bias)
    assert jnp.allclose(out, ref, atol=1e-3, rtol=1e-3), "mismatch vs reference"

    # Second shape: B*H*W not a multiple of 128 after flattening.
    x2 = jax.random.normal(jax.random.PRNGKey(1), (B, C_in, 10, 10),
                           dtype=jnp.float32)
    out2 = jax.block_until_ready(delayed_conv_forward(x2, weight, bias))
    ref2 = reference_forward(x2.astype(jnp.bfloat16).astype(jnp.float32), wq, bias)
    assert out2.shape == (B, C_out, 10, 10)
    assert jnp.allclose(out2, ref2, atol=1e-3, rtol=1e-3), "mismatch (odd shape)"

    # Optional bf16 output stream (halves the dominant output HBM traffic);
    # looser tolerance accounts for the final bf16 rounding.
    out3 = jax.block_until_ready(
        delayed_conv_forward(x, weight, bias, out_dtype=jnp.bfloat16))
    assert out3.dtype == jnp.bfloat16
    assert jnp.allclose(out3.astype(jnp.float32), ref, atol=5e-2, rtol=3e-2), \
        "mismatch (bf16 output)"

    print("KERNEL_OK")
</pallas_src>

<mosaic_0001>
module attributes {stable_mosaic.version = 11 : i64} {
  func.func @kernel(%arg0: i32, %arg1: i32, %arg2: memref<1x4x128xbf16, #tpu.memory_space<vmem>>, %arg3: memref<1x4x128xbf16, #tpu.memory_space<vmem>>, %arg4: memref<8x36xbf16, #tpu.memory_space<vmem>>, %arg5: memref<8x1xf32, #tpu.memory_space<vmem>>, %arg6: memref<1x8x128xf32, #tpu.memory_space<vmem>>) attributes {dimension_semantics = [#tpu.dimension_semantics<parallel>, #tpu.dimension_semantics<parallel>], iteration_bounds = array<i64: 2, 3>, scalar_prefetch = 0 : i64, scratch_operands = 0 : i64, tpu.core_type = #tpu.core_type<tc>, window_params = [{transform_indices = @transform_0, window_bounds = array<i64: 1, 4, 128>}, {transform_indices = @transform_1, window_bounds = array<i64: 1, 4, 128>}, {pipeline_mode = #tpu.pipeline_mode<synchronous>, transform_indices = @transform_2, window_bounds = array<i64: 8, 36>}, {pipeline_mode = #tpu.pipeline_mode<synchronous>, transform_indices = @transform_3, window_bounds = array<i64: 8, 1>}, {transform_indices = @transform_4, window_bounds = array<i64: 1, 8, 128>}]} {
    %c0 = arith.constant 0 : index
    %c0_0 = arith.constant 0 : index
    %c0_1 = arith.constant 0 : index
    %0 = vector.load %arg2[%c0, %c0_0, %c0_1] : memref<1x4x128xbf16, #tpu.memory_space<vmem>>, vector<1x4x128xbf16>
    %1 = vector.shape_cast %0 : vector<1x4x128xbf16> to vector<4x128xbf16>
    %c0_2 = arith.constant 0 : index
    %c0_3 = arith.constant 0 : index
    %c0_4 = arith.constant 0 : index
    %2 = vector.load %arg3[%c0_2, %c0_3, %c0_4] : memref<1x4x128xbf16, #tpu.memory_space<vmem>>, vector<1x4x128xbf16>
    %3 = vector.shape_cast %2 : vector<1x4x128xbf16> to vector<4x128xbf16>
    %4 = tpu.concatenate %1, %3 in 1 : vector<4x128xbf16>, vector<4x128xbf16> -> vector<4x256xbf16>
    %5 = vector.extract_strided_slice %4 {offsets = [0, 0], sizes = [4, 128], strides = [1, 1]} : vector<4x256xbf16> to vector<4x128xbf16>
    %6 = vector.extract_strided_slice %4 {offsets = [0, 1], sizes = [4, 128], strides = [1, 1]} : vector<4x256xbf16> to vector<4x128xbf16>
    %7 = vector.extract_strided_slice %4 {offsets = [0, 2], sizes = [4, 128], strides = [1, 1]} : vector<4x256xbf16> to vector<4x128xbf16>
    %8 = vector.extract_strided_slice %4 {offsets = [0, 18], sizes = [4, 128], strides = [1, 1]} : vector<4x256xbf16> to vector<4x128xbf16>
    %9 = vector.extract_strided_slice %4 {offsets = [0, 19], sizes = [4, 128], strides = [1, 1]} : vector<4x256xbf16> to vector<4x128xbf16>
    %10 = vector.extract_strided_slice %4 {offsets = [0, 20], sizes = [4, 128], strides = [1, 1]} : vector<4x256xbf16> to vector<4x128xbf16>
    %11 = vector.extract_strided_slice %4 {offsets = [0, 36], sizes = [4, 128], strides = [1, 1]} : vector<4x256xbf16> to vector<4x128xbf16>
    %12 = vector.extract_strided_slice %4 {offsets = [0, 37], sizes = [4, 128], strides = [1, 1]} : vector<4x256xbf16> to vector<4x128xbf16>
    %13 = vector.extract_strided_slice %4 {offsets = [0, 38], sizes = [4, 128], strides = [1, 1]} : vector<4x256xbf16> to vector<4x128xbf16>
    %14 = tpu.concatenate %5, %6, %7, %8, %9, %10, %11, %12, %13 in 0 : vector<4x128xbf16>, vector<4x128xbf16>, vector<4x128xbf16>, vector<4x128xbf16>, vector<4x128xbf16>, vector<4x128xbf16>, vector<4x128xbf16>, vector<4x128xbf16>, vector<4x128xbf16> -> vector<36x128xbf16>
    %c0_5 = arith.constant 0 : index
    %c0_6 = arith.constant 0 : index
    %15 = vector.load %arg4[%c0_5, %c0_6] : memref<8x36xbf16, #tpu.memory_space<vmem>>, vector<8x36xbf16>
    %cst = arith.constant dense<0.000000e+00> : vector<8x128xf32>
    %16 = tpu.matmul %15, %14, %cst {dimension_numbers = #tpu.dot_dimension_numbers<[1], [0], [0], [1], [0, 0, 1, 1], [], []>} : vector<8x36xbf16>, vector<36x128xbf16>, vector<8x128xf32> -> vector<8x128xf32>
    %c0_7 = arith.constant 0 : index
    %c0_8 = arith.constant 0 : index
    %17 = vector.load %arg5[%c0_7, %c0_8] : memref<8x1xf32, #tpu.memory_space<vmem>>, vector<8x1xf32>
    %18 = vector.broadcast %17 : vector<8x1xf32> to vector<8x128xf32>
    %19 = arith.addf %16, %18 : vector<8x128xf32>
    %cst_9 = arith.constant 0.000000e+00 : f32
    %20 = vector.broadcast %cst_9 : f32 to vector<8x128xf32>
    %21 = arith.maximumf %19, %20 : vector<8x128xf32>
    %c0_10 = arith.constant 0 : index
    %c0_11 = arith.constant 0 : index
    %c0_12 = arith.constant 0 : index
    %22 = vector.load %arg6[%c0_10, %c0_11, %c0_12] : memref<1x8x128xf32, #tpu.memory_space<vmem>>, vector<1x8x128xf32>
    %23 = vector.shape_cast %22 : vector<1x8x128xf32> to vector<8x128xf32>
    %24 = vector.shape_cast %21 : vector<8x128xf32> to vector<1x8x128xf32>
    tpu.vector_store %arg6[%c0_10, %c0_11, %c0_12], %24 {strides = array<i32>} : memref<1x8x128xf32, #tpu.memory_space<vmem>>, vector<1x8x128xf32>,
    return
  }
  func.func @transform_0(%arg0: i32, %arg1: i32) -> (i32, i32, i32) {
    %c0_i32 = arith.constant 0 : i32
    %c0_i32_0 = arith.constant 0 : i32
    return %arg0, %c0_i32, %arg1 : i32, i32, i32
  }
  func.func @transform_1(%arg0: i32, %arg1: i32) -> (i32, i32, i32) {
    %c1_i32 = arith.constant 1 : i32
    %0 = arith.addi %arg1, %c1_i32 : i32
    %c1_i32_0 = arith.constant 1 : i32
    %1 = arith.muli %0, %c1_i32_0 : i32
    %c0_i32 = arith.constant 0 : i32
    %c0_i32_1 = arith.constant 0 : i32
    return %arg0, %c0_i32, %1 : i32, i32, i32
  }
  func.func @transform_2(%arg0: i32, %arg1: i32) -> (i32, i32) {
    %c0_i32 = arith.constant 0 : i32
    %c0_i32_0 = arith.constant 0 : i32
    %c0_i32_1 = arith.constant 0 : i32
    return %c0_i32, %c0_i32_0 : i32, i32
  }
  func.func @transform_3(%arg0: i32, %arg1: i32) -> (i32, i32) {
    %c0_i32 = arith.constant 0 : i32
    %c0_i32_0 = arith.constant 0 : i32
    %c0_i32_1 = arith.constant 0 : i32
    return %c0_i32, %c0_i32_0 : i32, i32
  }
  func.func @transform_4(%arg0: i32, %arg1: i32) -> (i32, i32, i32) {
    %c0_i32 = arith.constant 0 : i32
    %c0_i32_0 = arith.constant 0 : i32
    return %arg0, %c0_i32, %arg1 : i32, i32, i32
  }
}

</mosaic_0001>

<llo_original>
// kernel: delayed_conv_forward.1
$region0: #{delayed_conv_forward.1}
  #allocation0 [shape = 'u32[]', space=smem, size = 0x4, offset = 0x4, fixed_abs, tag = 'smem constant byte address 0x4 - core index']
  #allocation1 [shape = 'u32[72,128]{1,0:T(1,128)}', space=vmem, size = 0x9000, scoped, tag = 'internal scratch']
  %s0 = inlined_call_operand.vmem [shape: bf16[2,4,512], index: 0, kind: input, shape index: {}, may-alias: {0,1}]
  %s1 = inlined_call_operand.vmem [shape: bf16[2,4,512], index: 1, kind: input, shape index: {}, may-alias: {0,1}]
  %s2 = inlined_call_operand.vmem [shape: bf16[8,36], index: 2, kind: input, shape index: {}]
  %s3 = inlined_call_operand.vmem [shape: f32[8,1], index: 3, kind: input, shape index: {}]
  %s4 = inlined_call_operand.vmem [shape: f32[2,8,384], index: 4, kind: output, shape index: {}]
  %s5 = sld [smem:[#allocation0]]
  $region49: #{delayed_conv_forward.1} parent=0
    _
  %s7 = ssub.s32 1, %s5
  %s8 = scalar_select 0, %s7, %s5
  loop: start=0, step=1, limit=8
  $region2: #{delayed_conv_forward.1} parent=0 // loop_pre_header
    _
  $region3: #{delayed_conv_forward.1} parent=0 // loop_header
    %s10 = sphi 0, %s14
    %p11 = scmp.ge.s32.totalorder %s10, 8
    %s17 = sphi 0, %s29
    %s18 = sphi 0, %s25
    %s19 = sphi 0, %s17
    %s20 = sphi 0, %s18
    %s21 = sphi 0, %s19
    %s22 = sphi 0, %s20
    %s34 = sphi 0, %s36
    %s37 = sphi 0, %s34
    %s38 = sphi 0, %s37
    %s54 = sphi 0, %s38
    %s64 = sphi 0, %s66
    %s67 = sphi 0, %s64
    %s68 = sphi 0, %s67
    %s84 = sphi 0, %s68
    %s88 = sphi 0, %s88
    %s90 = sphi 0, %s88
    %s91 = sphi 0, %s90
    %s105 = sphi 0, %s91
    %s109 = sphi 0, %s109
    %s111 = sphi 0, %s109
    %s112 = sphi 0, %s111
    %s126 = sphi 0, %s112
    %s134 = sphi 0, %s136
    %s137 = sphi 0, %s134
    %s138 = sphi 0, %s137
    %s154 = sphi 0, %s138
  $region4: #{delayed_conv_forward.1} parent=0 // loop_header_branch
    %13 = sbr.rel (%p11) target = $region8
  $region5: #{delayed_conv_forward.1} parent=0 // loop_body
    %s15 = ssub.s32 %s10, 1
    %s16 = ssub.s32 %s10, 2
    %s23 = sadd.s32 1, %s18
    %p24 = scmp.ge.s32.totalorder %s23, 3
    %s25 = scalar_select %p24, 0, %s23
    %s26 = sadd.s32 1, %s17
    %s27 = scalar_select %p24, %s26, %s17
    %p28 = scmp.ge.s32.totalorder %s27, 2
    %s29 = scalar_select %p28, 0, %s27
    %s30 = ssub.s32 %s17, %s29
    %s31 = ssub.s32 %s18, %s25
    %s32 = sor.u32 %s30, %s31
    %p33 = scmp.eq.s32.totalorder %s32, 0
    %s35 = sadd.s32 %s34, 1
    %s36 = scalar_select %p33, %s34, %s35
    %p39 = pneg %p33
    %p40 = scmp.eq.s32.totalorder %s10, 5
    %p41 = por %p39, %p40
    %p42 = scmp.ne.s32.totalorder %s34, %s37
    %p43 = scmp.eq.s32.totalorder %s10, 0
    %p44 = por %p42, %p43
    %p45 = scmp.ne.s32.totalorder %s34, %s37
    %p46 = scmp.eq.s32.totalorder %s15, 5
    %p47 = por %p45, %p46
    %p48 = scmp.ne.s32.totalorder %s37, %s38
    %p49 = scmp.eq.s32.totalorder %s15, 0
    %p50 = por %p48, %p49
    %p51 = scmp.ne.s32.totalorder %s37, %s38
    %p52 = scmp.eq.s32.totalorder %s16, 5
    %p53 = por %p51, %p52
    %p55 = scmp.ne.s32.totalorder %s38, %s54
    %p56 = scmp.eq.s32.totalorder %s16, 0
    %p57 = por %p55, %p56
    %s58 = sadd.s32 %s18, 1
    %s59 = sadd.s32 %s25, 1
    %s60 = ssub.s32 %s17, %s29
    %s61 = ssub.s32 %s58, %s59
    %s62 = sor.u32 %s60, %s61
    %p63 = scmp.eq.s32.totalorder %s62, 0
    %s65 = sadd.s32 %s64, 1
    %s66 = scalar_select %p63, %s64, %s65
    %p69 = pneg %p63
    %p70 = scmp.eq.s32.totalorder %s10, 5
    %p71 = por %p69, %p70
    %p72 = scmp.ne.s32.totalorder %s64, %s67
    %p73 = scmp.eq.s32.totalorder %s10, 0
    %p74 = por %p72, %p73
    %p75 = scmp.ne.s32.totalorder %s64, %s67
    %p76 = scmp.eq.s32.totalorder %s15, 5
    %p77 = por %p75, %p76
    %p78 = scmp.ne.s32.totalorder %s67, %s68
    %p79 = scmp.eq.s32.totalorder %s15, 0
    %p80 = por %p78, %p79
    %p81 = scmp.ne.s32.totalorder %s67, %s68
    %p82 = scmp.eq.s32.totalorder %s16, 5
    %p83 = por %p81, %p82
    %p85 = scmp.ne.s32.totalorder %s68, %s84
    %p86 = scmp.eq.s32.totalorder %s16, 0
    %p87 = por %p85, %p86
    %s89 = sadd.s32 %s88, 1
    %p92 = scmp.eq.s32.totalorder %s10, 5
    %p93 = scmp.ne.s32.totalorder %s88, %s90
    %p94 = scmp.eq.s32.totalorder %s10, 0
    %p95 = por %p93, %p94
    %p96 = scmp.ne.s32.totalorder %s88, %s90
    %p97 = scmp.eq.s32.totalorder %s15, 5
    %p98 = por %p96, %p97
    %p99 = scmp.ne.s32.totalorder %s90, %s91
    %p100 = scmp.eq.s32.totalorder %s15, 0
    %p101 = por %p99, %p100
    %p102 = scmp.ne.s32.totalorder %s90, %s91
    %p103 = scmp.eq.s32.totalorder %s16, 5
    %p104 = por %p102, %p103
    %p106 = scmp.ne.s32.totalorder %s91, %s105
    %p107 = scmp.eq.s32.totalorder %s16, 0
    %p108 = por %p106, %p107
    %s110 = sadd.s32 %s109, 1
    %p113 = scmp.eq.s32.totalorder %s10, 5
    %p114 = scmp.ne.s32.totalorder %s109, %s111
    %p115 = scmp.eq.s32.totalorder %s10, 0
    %p116 = por %p114, %p115
    %p117 = scmp.ne.s32.totalorder %s109, %s111
    %p118 = scmp.eq.s32.totalorder %s15, 5
    %p119 = por %p117, %p118
    %p120 = scmp.ne.s32.totalorder %s111, %s112
    %p121 = scmp.eq.s32.totalorder %s15, 0
    %p122 = por %p120, %p121
    %p123 = scmp.ne.s32.totalorder %s111, %s112
    %p124 = scmp.eq.s32.totalorder %s16, 5
    %p125 = por %p123, %p124
    %p127 = scmp.ne.s32.totalorder %s112, %s126
    %p128 = scmp.eq.s32.totalorder %s16, 0
    %p129 = por %p127, %p128
    %s130 = ssub.s32 %s17, %s29
    %s131 = ssub.s32 %s18, %s25
    %s132 = sor.u32 %s130, %s131
    %p133 = scmp.eq.s32.totalorder %s132, 0
    %s135 = sadd.s32 %s134, 1
    %s136 = scalar_select %p133, %s134, %s135
    %p139 = pneg %p133
    %p140 = scmp.eq.s32.totalorder %s10, 5
    %p141 = por %p139, %p140
    %p142 = scmp.ne.s32.totalorder %s134, %s137
    %p143 = scmp.eq.s32.totalorder %s10, 0
    %p144 = por %p142, %p143
    %p145 = scmp.ne.s32.totalorder %s134, %s137
    %p146 = scmp.eq.s32.totalorder %s15, 5
    %p147 = por %p145, %p146
    %p148 = scmp.ne.s32.totalorder %s137, %s138
    %p149 = scmp.eq.s32.totalorder %s15, 0
    %p150 = por %p148, %p149
    %p151 = scmp.ne.s32.totalorder %s137, %s138
    %p152 = scmp.eq.s32.totalorder %s16, 5
    %p153 = por %p151, %p152
    %p155 = scmp.ne.s32.totalorder %s138, %s154
    %p156 = scmp.eq.s32.totalorder %s16, 0
    %p157 = por %p155, %p156
    %p158 = scmp.le.s32.totalorder 1, %s10
    %p159 = scmp.lt.s32.totalorder %s10, 7
    %p160 = pnand %p158, %p159
    %p161 = pneg %p160
    // Predicated region
    $region9: #{delayed_conv_forward.1} parent=5 // pred_check
      _
    $region10: #{delayed_conv_forward.1} parent=5 // pred_check_branch
      %163 = sbr.rel (%p160) target = $region12
    $region11: #{delayed_conv_forward.1} parent=5 // pred_region
      %s164 = ssub.s32 %s10, 1
      // Predicated region
      $region13: #{delayed_conv_forward.1} parent=11 // pred_check
        %p165 = pneg %p101
      $region14: #{delayed_conv_forward.1} parent=11 // pred_check_branch
        %167 = sbr.rel (%p165) target = $region16
      $region15: #{delayed_conv_forward.1} parent=11 // pred_region
        _
      $region16: #{delayed_conv_forward.1} parent=11 // pred_fallthru
        _
      // Predicated region
      $region17: #{delayed_conv_forward.1} parent=11 // pred_check
        %p168 = pneg %p122
      $region18: #{delayed_conv_forward.1} parent=11 // pred_check_branch
        %170 = sbr.rel (%p168) target = $region20
      $region19: #{delayed_conv_forward.1} parent=11 // pred_region
        _
      $region20: #{delayed_conv_forward.1} parent=11 // pred_fallthru
        _
    $region12: #{delayed_conv_forward.1} parent=5 // pred_fallthru
      _
    %p171 = scmp.lt.s32.totalorder %s10, 6
    // Predicated region
    $region21: #{delayed_conv_forward.1} parent=5 // pred_check
      %p172 = pneg %p171
    $region22: #{delayed_conv_forward.1} parent=5 // pred_check_branch
      %174 = sbr.rel (%p172) target = $region24
    $region23: #{delayed_conv_forward.1} parent=5 // pred_region
      // Predicated region
      $region25: #{delayed_conv_forward.1} parent=23 // pred_check
        %p175 = pneg %p44
      $region26: #{delayed_conv_forward.1} parent=23 // pred_check_branch
        %177 = sbr.rel (%p175) target = $region28
      $region27: #{delayed_conv_forward.1} parent=23 // pred_region
        %p178 = scmp.lt.s32.totalorder %s17, 1
        %s179 = scalar_select %p178, %s17, 1
        %p180 = scmp.lt.s32.totalorder %s18, 3
        %s181 = scalar_select %p180, %s18, 3
        %s182 = smul.addr %s179, 4
        %s183 = sadd.s32 %s181, %s182
        %s184 = smul.addr %s183, 2
        %s185 = scalar_lea.vmem %s0, %s184
      $region28: #{delayed_conv_forward.1} parent=23 // pred_fallthru
        _
      // Predicated region
      $region29: #{delayed_conv_forward.1} parent=23 // pred_check
        %p186 = pneg %p74
      $region30: #{delayed_conv_forward.1} parent=23 // pred_check_branch
        %188 = sbr.rel (%p186) target = $region32
      $region31: #{delayed_conv_forward.1} parent=23 // pred_region
        %s189 = sadd.s32 %s18, 1
        %p190 = scmp.lt.s32.totalorder %s17, 1
        %s191 = scalar_select %p190, %s17, 1
        %p192 = scmp.lt.s32.totalorder %s189, 3
        %s193 = scalar_select %p192, %s189, 3
        %s194 = smul.addr %s191, 4
        %s195 = sadd.s32 %s193, %s194
        %s196 = smul.addr %s195, 2
        %s197 = scalar_lea.vmem %s1, %s196
        %s198 = sadd.s32 %s18, 1
      $region32: #{delayed_conv_forward.1} parent=23 // pred_fallthru
        _
    $region24: #{delayed_conv_forward.1} parent=5 // pred_fallthru
      _
    %p199 = scmp.le.s32.totalorder 1, %s10
    %p200 = scmp.lt.s32.totalorder %s10, 7
    %p201 = pnand %p199, %p200
    %p202 = pneg %p201
    // Predicated region
    $region33: #{delayed_conv_forward.1} parent=5 // pred_check
      _
    $region34: #{delayed_conv_forward.1} parent=5 // pred_check_branch
      %204 = sbr.rel (%p201) target = $region36
    $region35: #{delayed_conv_forward.1} parent=5 // pred_region
      %s205 = ssub.s32 %s10, 1
      %p206 = scmp.lt.s32.totalorder %s19, 1
      %s207 = scalar_select %p206, %s19, 1
      %p208 = scmp.lt.s32.totalorder %s20, 3
      %s209 = scalar_select %p208, %s20, 3
      %s210 = smul.addr %s207, 4
      %s211 = sadd.s32 %s209, %s210
      %s212 = smul.addr %s211, 2
      %s213 = scalar_lea.vmem %s0, %s212
      %p214 = pneg %p50
      %p215 = pneg %p47
      %s216 = sadd.s32 %s20, 1
      %p217 = scmp.lt.s32.totalorder %s19, 1
      %s218 = scalar_select %p217, %s19, 1
      %p219 = scmp.lt.s32.totalorder %s216, 3
      %s220 = scalar_select %p219, %s216, 3
      %s221 = smul.addr %s218, 4
      %s222 = sadd.s32 %s220, %s221
      %s223 = smul.addr %s222, 2
      %s224 = scalar_lea.vmem %s1, %s223
      %p225 = pneg %p80
      %p226 = pneg %p77
      %p227 = pneg %p101
      %p228 = pneg %p98
      %p229 = pneg %p122
      %p230 = pneg %p119
      %p231 = pneg %p150
      %p232 = pneg %p147
      %p233 = scmp.lt.s32.totalorder %s19, 1
      %s234 = scalar_select %p233, %s19, 1
      %p235 = scmp.lt.s32.totalorder %s20, 2
      %s236 = scalar_select %p235, %s20, 2
      %s237 = smul.addr %s234, 3
      %s238 = sadd.s32 %s236, %s237
      %s239 = smul.addr %s238, 8
      %s240 = scalar_lea.vmem %s4, %s239
      %p241 = scmp.lt.s32.totalorder %s19, 1
      %s242 = scalar_select %p241, %s19, 1
      %p243 = scmp.lt.s32.totalorder %s20, 3
      %s244 = scalar_select %p243, %s20, 3
      %s245 = smul.addr %s242, 4
      %s246 = sadd.s32 %s244, %s245
      %s247 = smul.addr %s246, 2
      %s248 = scalar_lea.vmem %s0, %s247
      %s249 = sadd.s32 %s20, 1
      %p250 = scmp.lt.s32.totalorder %s19, 1
      %s251 = scalar_select %p250, %s19, 1
      %p252 = scmp.lt.s32.totalorder %s249, 3
      %s253 = scalar_select %p252, %s249, 3
      %s254 = smul.addr %s251, 4
      %s255 = sadd.s32 %s253, %s254
      %s256 = smul.addr %s255, 2
      %s257 = scalar_lea.vmem %s1, %s256
      %s258 = sadd.s32 %s20, 1
      %p259 = scmp.lt.s32.totalorder %s19, 1
      %s260 = scalar_select %p259, %s19, 1
      %p261 = scmp.lt.s32.totalorder %s20, 2
      %s262 = scalar_select %p261, %s20, 2
      %s263 = smul.addr %s260, 3
      %s264 = sadd.s32 %s262, %s263
      %s265 = smul.addr %s264, 8
      %s266 = scalar_lea.vmem %s4, %s265
      %v268 = vld [vmem:[%s248] sm:$0x3]
      %v269 = vld [vmem:[%s257] sm:$0x3]
      %v272 = vrot.slane %v268, 6
      %v273 = vrot.slane %v269, 6
      %274 = vrot.lane.b32.xlu0 %v272, 127
      %v275 = vpop.permute.xlu0 %274
      %276 = vrot.lane.b32.xlu0 %v273, 127
      %v277 = vpop.permute.xlu0 %276
      %vm278 = vcmask 1039360
      %v279 = vsel %vm278, %v275, %v277
      %v280 = vrot.slane %v268, 4
      %v281 = vrot.slane %v269, 4
      %282 = vrot.lane.b32.xlu0 %v280, 126
      %v283 = vpop.permute.xlu0 %282
      %284 = vrot.lane.b32.xlu0 %v281, 126
      %v285 = vpop.permute.xlu0 %284
      %vm286 = vcmask 1031168
      %v287 = vsel %vm286, %v283, %v285
      %v288 = vrot.slane %v268, 2
      %v289 = vrot.slane %v269, 2
      %290 = vrot.lane.b32.xlu0 %v288, 110
      %v291 = vpop.permute.xlu0 %290
      %292 = vrot.lane.b32.xlu0 %v289, 110
      %v293 = vpop.permute.xlu0 %292
      %vm294 = vcmask 900096
      %v295 = vsel %vm294, %v291, %v293
      %296 = vrot.lane.b32.xlu0 %v268, 109
      %v297 = vpop.permute.xlu0 %296
      %298 = vrot.lane.b32.xlu0 %v269, 109
      %v299 = vpop.permute.xlu0 %298
      %vm300 = vcmask 891904
      %v301 = vsel %vm300, %v297, %v299
      %302 = vrot.lane.b32.xlu0 %v272, 108
      %v303 = vpop.permute.xlu0 %302
      %304 = vrot.lane.b32.xlu0 %v273, 108
      %v305 = vpop.permute.xlu0 %304
      %vm306 = vcmask 883712
      %v307 = vsel %vm306, %v303, %v305
      %308 = vrot.lane.b32.xlu0 %v280, 92
      %v309 = vpop.permute.xlu0 %308
      %310 = vrot.lane.b32.xlu0 %v281, 92
      %v311 = vpop.permute.xlu0 %310
      %vm312 = vcmask 752640
      %v313 = vsel %vm312, %v309, %v311
      %314 = vrot.lane.b32.xlu0 %v288, 91
      %v315 = vpop.permute.xlu0 %314
      %316 = vrot.lane.b32.xlu0 %v289, 91
      %v317 = vpop.permute.xlu0 %316
      %vm318 = vcmask 744448
      %v319 = vsel %vm318, %v315, %v317
      %320 = vrot.lane.b32.xlu0 %v268, 90
      %v321 = vpop.permute.xlu0 %320
      %322 = vrot.lane.b32.xlu0 %v269, 90
      %v323 = vpop.permute.xlu0 %322
      %vm324 = vcmask 736256
      %v325 = vsel %vm324, %v321, %v323
      %vm326 = vcmask 1041408
      %v329 = vsel %vm326, %v268, %v279
      %vm330 = vcmask 1043456
      %v332 = vsel %vm330, %v329, %v287
      %vm333 = vcmask 1045504
      %v335 = vsel %vm333, %v332, %v295
      %v339 = vsel %vm326, %v301, %v307
      %v341 = vsel %vm330, %v339, %v313
      %v343 = vsel %vm333, %v341, %v319
      %v345 = vld [vmem:[%s2] sm:$0xf]
      %v346 = vld [vmem:[%s3] sm:$0xff]
      %348 = vset.pattern.permute.xlu0 0
      %349 = vperm.xlu0 %348, %v346
      %v350 = vpop.permute.xlu0 %349
      %vm352 = vcmask 293888
      %v354 = vsel %vm352, %v345, 0
      %v357 = vsel %vm326, %v325, 0
      %359 = vmatpush.bf16.msra.mxu0 0
      %360 = vmatpush.bf16.msra.mxu0 0
      %361 = vmatpush.bf16.msra.mxu0 0
      %362 = vmatpush.bf16.msra.mxu0 0
      %363 = vmatpush.bf16.msra.mxu0 0
      %364 = vmatpush.bf16.msra.mxu0 %v357
      %365 = vmatpush.bf16.msra.mxu0 %v343
      %366 = vmatpush.bf16.msra.mxu0 %v335
      %367 = vmatmul.bf16.gmra.mxu0 %v354
      %v368 = vpop.f32.mrf.mxu0
      %v369 = vadd.f32 %v350, %v368
      %v370 = vpop.f32.mrf.mxu0
      %371 = vdwg.mxu0
      %v372 = vmax.f32 %v369, 0.0
      %373 = vst [vmem:[%s266] sm:$0xff] %v372
      %p374 = scmp.lt.s32.totalorder %s19, 1
      %s375 = scalar_select %p374, %s19, 1
      %p376 = scmp.lt.s32.totalorder %s20, 2
      %s377 = scalar_select %p376, %s20, 2
      %s378 = smul.addr %s375, 3
      %s379 = sadd.s32 %s377, %s378
      %s380 = smul.addr %s379, 8
      %s381 = scalar_lea.vmem %s4, %s380
      // Predicated region
      $region37: #{delayed_conv_forward.1} parent=35 // pred_check
        %p382 = pneg %p147
      $region38: #{delayed_conv_forward.1} parent=35 // pred_check_branch
        %384 = sbr.rel (%p382) target = $region40
      $region39: #{delayed_conv_forward.1} parent=35 // pred_region
        _
      $region40: #{delayed_conv_forward.1} parent=35 // pred_fallthru
        _
    $region36: #{delayed_conv_forward.1} parent=5 // pred_fallthru
      _
    %p385 = scmp.le.s32.totalorder 2, %s10
    // Predicated region
    $region41: #{delayed_conv_forward.1} parent=5 // pred_check
      %p386 = pneg %p385
    $region42: #{delayed_conv_forward.1} parent=5 // pred_check_branch
      %388 = sbr.rel (%p386) target = $region44
    $region43: #{delayed_conv_forward.1} parent=5 // pred_region
      %s389 = ssub.s32 %s10, 2
      // Predicated region
      $region45: #{delayed_conv_forward.1} parent=43 // pred_check
        %p390 = pneg %p153
      $region46: #{delayed_conv_forward.1} parent=43 // pred_check_branch
        %392 = sbr.rel (%p390) target = $region48
      $region47: #{delayed_conv_forward.1} parent=43 // pred_region
        %p393 = scmp.lt.s32.totalorder %s21, 1
        %s394 = scalar_select %p393, %s21, 1
        %p395 = scmp.lt.s32.totalorder %s22, 2
        %s396 = scalar_select %p395, %s22, 2
        %s397 = smul.addr %s394, 3
        %s398 = sadd.s32 %s396, %s397
        %s399 = smul.addr %s398, 8
        %s400 = scalar_lea.vmem %s4, %s399
      $region48: #{delayed_conv_forward.1} parent=43 // pred_fallthru
        _
    $region44: #{delayed_conv_forward.1} parent=5 // pred_fallthru
      _
  $region6: #{delayed_conv_forward.1} parent=0 // loop_footer
    %s14 = sadd.s32 1, %s10
  $region7: #{delayed_conv_forward.1} parent=0 // loop_footer_branch
    %9 = sbr.rel target = $region3
  $region8: #{delayed_conv_forward.1} parent=0 // loop_exit
    _

</llo_original>
